<compile_context>
chip_gen: v7x
topology: tpu7x:2x2x1
jax: 0.10.0
libtpu: 0.0.40
codegen_flags: <defaults>
</compile_context>

<pallas_src>
import functools

import jax
import jax.numpy as jnp
from jax.experimental import pallas as pl
from jax.experimental.pallas import tpu as pltpu


# ---------------------------------------------------------------------------
# Kernels
# ---------------------------------------------------------------------------

def _ce_rowtile_kernel(x_ref, t_ref, o_ref, *, epsilon, num_classes, n_total, tile_n):
    """Row-tiled path: one (tile_n, C) logits block per grid step -> one partial sum."""
    i = pl.program_id(0)

    x = x_ref[...].astype(jnp.float32)                                   # (tn, C)
    labels = t_ref[...]                                                  # (tn, 1) int32

    # Numerically stable log-sum-exp per row.
    m = jnp.max(x, axis=1, keepdims=True)                                # (tn, 1)
    shifted = x - m                                                      # (tn, C)
    lse = jnp.log(jnp.sum(jnp.exp(shifted), axis=1, keepdims=True))      # (tn, 1)

    # Smoothed-CE identity with a single weighted reduction:
    #   loss_row = lse(shifted) - sum_c w_c * shifted_c,
    #   w_c = eps/C + (1-eps)*1[c==label],  sum_c w_c == 1.
    base = epsilon / num_classes
    class_ids = jax.lax.broadcasted_iota(jnp.int32, (1, x.shape[1]), 1)  # (1, C)
    w = jnp.where(class_ids == labels, 1.0 - epsilon + base, base)       # (tn, C) via broadcast
    lin = jnp.sum(w * shifted, axis=1, keepdims=True)                    # (tn, 1)
    per_row = lse - lin                                                  # (tn, 1)

    # Mask padded rows of the last block (divide by the full N in the wrapper).
    row_ids = i * tile_n + jax.lax.broadcasted_iota(jnp.int32, (tile_n, 1), 0)
    per_row = jnp.where(row_ids < n_total, per_row, 0.0)

    o_ref[...] = jnp.sum(per_row).reshape(1, 1, 1)


def _ce_classtile_kernel(x_ref, t_ref, o_ref, m_sc, l_sc, s_sc, *,
                         epsilon, num_classes, n_total, tile_n, tile_c):
    """Class-tiled fallback for very large C: online log-sum-exp over class blocks."""
    i = pl.program_id(0)   # row block   (parallel)
    k = pl.program_id(1)   # class block (serial reduction, resident scratch)

    @pl.when(k == 0)
    def _init():
        m_sc[...] = jnp.full_like(m_sc, -jnp.inf)
        l_sc[...] = jnp.zeros_like(l_sc)
        s_sc[...] = jnp.zeros_like(s_sc)

    x = x_ref[...].astype(jnp.float32)                                   # (tn, tc)
    labels = t_ref[...]                                                  # (tn, 1) int32

    col = k * tile_c + jax.lax.broadcasted_iota(jnp.int32, (1, tile_c), 1)   # (1, tc)
    valid = col < num_classes                                            # mask padded class cols

    # Online LSE update (padded cols forced to -inf -> contribute 0).
    xm = jnp.where(valid, x, -jnp.inf)
    m_new = jnp.maximum(m_sc[...], jnp.max(xm, axis=1, keepdims=True))
    alpha = jnp.exp(m_sc[...] - m_new)
    l_sc[...] = alpha * l_sc[...] + jnp.sum(jnp.exp(xm - m_new), axis=1, keepdims=True)
    m_sc[...] = m_new

    # Linear (weighted-logit) part is exact, no shifting needed; zero padded cols so
    # OOB garbage (possibly NaN) cannot leak through 0*NaN.
    base = epsilon / num_classes
    w = jnp.where(col == labels, 1.0 - epsilon + base, base)             # (tn, tc)
    x_lin = jnp.where(valid, x, 0.0)
    s_sc[...] += jnp.sum(w * x_lin, axis=1, keepdims=True)

    @pl.when(k == pl.num_programs(1) - 1)
    def _finalize():
        per_row = (m_sc[...] + jnp.log(l_sc[...])) - s_sc[...]           # (tn, 1)
        row_ids = i * tile_n + jax.lax.broadcasted_iota(jnp.int32, (tile_n, 1), 0)
        per_row = jnp.where(row_ids < n_total, per_row, 0.0)
        o_ref[...] = jnp.sum(per_row).reshape(1, 1, 1)


# ---------------------------------------------------------------------------
# Wrapper
# ---------------------------------------------------------------------------

def _round_up(x, m):
    return ((x + m - 1) // m) * m


def _tpu_vmem_capacity():
    try:
        return int(pltpu.get_tpu_info().vmem_capacity_bytes)
    except Exception:
        return 128 << 20   # v5e/v6e default if query unavailable


def _vmem_need(tn, tc, in_itemsize):
    """Scoped-VMEM estimate: double-buffered input tiles + ~3 f32-sized intermediates
    (shifted / exp / weighted product) + labels/output/scratch headroom."""
    tn_p = _round_up(max(tn, 8), 8)
    tc_p = _round_up(max(tc, 128), 128)
    in_tile = tn_p * tc_p * in_itemsize
    f32_tile = tn_p * tc_p * 4
    return 2 * in_tile + 3 * f32_tile + (1 << 20)


def cross_entropy_label_smooth(inputs, targets, num_classes, epsilon=0.1,
                               tile_n=None, tile_c=None):
    """inputs: (N, C) float logits (f32 or bf16); targets: (N,) int labels. Scalar f32 loss."""
    n, c = inputs.shape
    assert c == num_classes
    itemsize = jnp.dtype(inputs.dtype).itemsize
    t2d = targets.astype(jnp.int32).reshape(n, 1)

    vmem_cap = _tpu_vmem_capacity()
    # Generation-aware budgets: v7x (64 MiB VMEM/TC) -> smaller tiles + harder cap.
    budget_per_buf = (4 << 20) if vmem_cap <= (64 << 20) else (8 << 20)
    cap_limit = int(0.75 * vmem_cap)

    # ---------------- choose tiling ----------------
    class_tiled = tile_c is not None
    if not class_tiled:
        if tile_n is None:
            tile_n = budget_per_buf // max(1, c * itemsize)
            tile_n = max(8, min(tile_n, 32768))          # bytes-driven, no small row cap
        if tile_n >= n:
            tile_n = n
        else:
            tile_n = max(8, (tile_n // 8) * 8)
        # Shrink until input tiles + f32 intermediates fit the scoped-VMEM cap.
        while tile_n > 8 and _vmem_need(tile_n, c, itemsize) > cap_limit:
            tile_n = max(8, ((tile_n // 2) // 8) * 8)
        if _vmem_need(tile_n, c, itemsize) > cap_limit:
            class_tiled = True                           # even 8 full rows don't fit -> tile classes

    if class_tiled:
        if tile_n is None or tile_n <= 0:
            tile_n = 128
        if tile_n >= n:
            tile_n = n
        else:
            tile_n = max(8, (tile_n // 8) * 8)
        if tile_c is None:
            tile_c = max(128, (budget_per_buf // max(1, tile_n * itemsize) // 128) * 128)
        tile_c = max(128, (min(tile_c, _round_up(c, 128)) // 128) * 128)
        while (tile_n > 8 or tile_c > 128) and _vmem_need(tile_n, tile_c, itemsize) > cap_limit:
            if tile_c > 128:
                tile_c = max(128, ((tile_c // 2) // 128) * 128)
            else:
                tile_n = max(8, ((tile_n // 2) // 8) * 8)

    eff_c = tile_c if class_tiled else c
    vmem_limit = int(min(cap_limit, max(_vmem_need(tile_n, eff_c, itemsize), 16 << 20)))

    cost = pl.CostEstimate(
        flops=5 * n * c,
        transcendentals=n * c,
        bytes_accessed=n * c * itemsize + n * 4 + 4 * pl.cdiv(n, tile_n),
    )

    # ---------------- launch ----------------
    if not class_tiled:
        num_blocks = pl.cdiv(n, tile_n)
        kernel = functools.partial(
            _ce_rowtile_kernel, epsilon=float(epsilon), num_classes=int(num_classes),
            n_total=int(n), tile_n=int(tile_n))
        partials = pl.pallas_call(
            kernel,
            out_shape=jax.ShapeDtypeStruct((num_blocks, 1, 1), jnp.float32),
            grid_spec=pltpu.PrefetchScalarGridSpec(
                num_scalar_prefetch=0,
                grid=(num_blocks,),
                in_specs=[
                    pl.BlockSpec((tile_n, c), lambda i: (i, 0)),    # streamed logits tiles
                    pl.BlockSpec((tile_n, 1), lambda i: (i, 0)),    # labels
                ],
                out_specs=pl.BlockSpec((1, 1, 1), lambda i: (i, 0, 0)),
            ),
            compiler_params=pltpu.CompilerParams(
                dimension_semantics=("parallel",),                  # both TCs on v7x
                vmem_limit_bytes=vmem_limit,
            ),
            cost_estimate=cost,
        )(inputs, t2d)
    else:
        num_row_blocks = pl.cdiv(n, tile_n)
        num_class_blocks = pl.cdiv(c, tile_c)
        kernel = functools.partial(
            _ce_classtile_kernel, epsilon=float(epsilon), num_classes=int(num_classes),
            n_total=int(n), tile_n=int(tile_n), tile_c=int(tile_c))
        partials = pl.pallas_call(
            kernel,
            out_shape=jax.ShapeDtypeStruct((num_row_blocks, 1, 1), jnp.float32),
            grid_spec=pltpu.PrefetchScalarGridSpec(
                num_scalar_prefetch=0,
                grid=(num_row_blocks, num_class_blocks),
                in_specs=[
                    pl.BlockSpec((tile_n, tile_c), lambda i, k: (i, k)),
                    pl.BlockSpec((tile_n, 1), lambda i, k: (i, 0)),
                ],
                out_specs=pl.BlockSpec((1, 1, 1), lambda i, k: (i, 0, 0)),
                scratch_shapes=[pltpu.VMEM((tile_n, 1), jnp.float32)] * 3,  # m, l, weighted sum
            ),
            compiler_params=pltpu.CompilerParams(
                dimension_semantics=("parallel", "arbitrary"),      # rows parallel, classes serial
                vmem_limit_bytes=vmem_limit,
            ),
            cost_estimate=cost,
        )(inputs, t2d)

    # Final reduction + mean over the FULL batch in the wrapper (padded rows were masked to 0).
    return jnp.sum(partials) / n


# ---------------------------------------------------------------------------
# Reference + tests
# ---------------------------------------------------------------------------

def _reference(inputs, targets, num_classes, epsilon=0.1):
    log_probs = jax.nn.log_softmax(inputs.astype(jnp.float32), axis=1)
    onehot = jax.nn.one_hot(targets, num_classes, dtype=jnp.float32)
    smooth = (1.0 - epsilon) * onehot + epsilon / num_classes
    return (-smooth * log_probs).mean(0).sum()


if __name__ == "__main__":
    epsilon = 0.1
    key = jax.random.PRNGKey(0)
    k1, k2, k3, k4, k5, k6 = jax.random.split(key, 6)

    # Test 1: small single block (batch=8, classes=32).
    nc1, b1 = 32, 8
    x1 = jax.random.normal(k1, (b1, nc1), dtype=jnp.float32)
    y1 = jax.random.randint(k2, (b1,), 0, nc1, dtype=jnp.int32)
    out1 = jax.block_until_ready(cross_entropy_label_smooth(x1, y1, nc1, epsilon))
    ref1 = _reference(x1, y1, nc1, epsilon)
    assert jnp.allclose(out1, ref1, atol=1e-4, rtol=1e-4), (out1, ref1)

    # Test 2: multi-block "parallel" grid with partial-sum outputs and a padded last row block.
    nc2, b2 = 32, 100
    x2 = jax.random.normal(k3, (b2, nc2), dtype=jnp.float32)
    y2 = jax.random.randint(k4, (b2,), 0, nc2, dtype=jnp.int32)
    out2 = jax.block_until_ready(
        cross_entropy_label_smooth(x2, y2, nc2, epsilon, tile_n=16))
    ref2 = _reference(x2, y2, nc2, epsilon)
    assert jnp.allclose(out2, ref2, atol=1e-4, rtol=1e-4), (out2, ref2)

    # Test 3: class-tiled online-LSE fallback (forced via tile_c) with padded rows AND
    # padded class columns (C=300 not a multiple of 128).
    nc3, b3 = 300, 20
    x3 = jax.random.normal(k5, (b3, nc3), dtype=jnp.float32)
    y3 = jax.random.randint(k6, (b3,), 0, nc3, dtype=jnp.int32)
    out3 = jax.block_until_ready(
        cross_entropy_label_smooth(x3, y3, nc3, epsilon, tile_n=8, tile_c=128))
    ref3 = _reference(x3, y3, nc3, epsilon)
    assert jnp.allclose(out3, ref3, atol=1e-4, rtol=1e-4), (out3, ref3)

    # Test 4: bf16 logits streamed as bf16, upcast in-kernel.
    x4 = x2.astype(jnp.bfloat16)
    out4 = jax.block_until_ready(
        cross_entropy_label_smooth(x4, y2, nc2, epsilon, tile_n=32))
    ref4 = _reference(x4, y2, nc2, epsilon)
    assert jnp.allclose(out4, ref4, atol=1e-3, rtol=1e-3), (out4, ref4)

    print("KERNEL_OK")
</pallas_src>

<mosaic_0001>
module attributes {stable_mosaic.version = 11 : i64} {
  func.func @_ce_rowtile_kernel(%arg0: i32, %arg1: memref<8x32xf32, #tpu.memory_space<vmem>>, %arg2: memref<8x1xi32, #tpu.memory_space<vmem>>, %arg3: memref<1x1x1xf32, #tpu.memory_space<vmem>>) attributes {dimension_semantics = [#tpu.dimension_semantics<parallel>], iteration_bounds = array<i64: 1>, scalar_prefetch = 0 : i64, scratch_operands = 0 : i64, tpu.core_type = #tpu.core_type<tc>, window_params = [{transform_indices = @transform_0, window_bounds = array<i64: 8, 32>}, {transform_indices = @transform_1, window_bounds = array<i64: 8, 1>}, {transform_indices = @transform_2, window_bounds = array<i64: 1, 1, 1>}]} {
    %c0 = arith.constant 0 : index
    %c0_0 = arith.constant 0 : index
    %0 = vector.load %arg1[%c0, %c0_0] : memref<8x32xf32, #tpu.memory_space<vmem>>, vector<8x32xf32>
    %c0_1 = arith.constant 0 : index
    %c0_2 = arith.constant 0 : index
    %1 = vector.load %arg2[%c0_1, %c0_2] : memref<8x1xi32, #tpu.memory_space<vmem>>, vector<8x1xi32>
    %cst = arith.constant dense<0xFF800000> : vector<8xf32>
    %2 = vector.multi_reduction <maximumf>, %0, %cst [1] : vector<8x32xf32> to vector<8xf32>
    %3 = vector.shape_cast %2 : vector<8xf32> to vector<8x1xf32>
    %4 = vector.broadcast %3 : vector<8x1xf32> to vector<8x32xf32>
    %5 = arith.subf %0, %4 : vector<8x32xf32>
    %6 = math.exp %5 : vector<8x32xf32>
    %cst_3 = arith.constant dense<0.000000e+00> : vector<8xf32>
    %7 = vector.multi_reduction <add>, %6, %cst_3 [1] : vector<8x32xf32> to vector<8xf32>
    %8 = vector.shape_cast %7 : vector<8xf32> to vector<8x1xf32>
    %9 = math.log %8 : vector<8x1xf32>
    %10 = tpu.iota {dimensions = array<i32: 1>} : vector<1x32xi32>
    %11 = vector.broadcast %10 : vector<1x32xi32> to vector<8x32xi32>
    %12 = vector.broadcast %1 : vector<8x1xi32> to vector<8x32xi32>
    %13 = arith.cmpi eq, %11, %12 : vector<8x32xi32>
    %cst_4 = arith.constant 0.903124988 : f32
    %cst_5 = arith.constant 3.125000e-03 : f32
    %14 = vector.broadcast %cst_4 : f32 to vector<8x32xf32>
    %15 = vector.broadcast %cst_5 : f32 to vector<8x32xf32>
    %16 = arith.select %13, %14, %15 : vector<8x32xi1>, vector<8x32xf32>
    %17 = arith.mulf %16, %5 : vector<8x32xf32>
    %cst_6 = arith.constant dense<0.000000e+00> : vector<8xf32>
    %18 = vector.multi_reduction <add>, %17, %cst_6 [1] : vector<8x32xf32> to vector<8xf32>
    %19 = vector.shape_cast %18 : vector<8xf32> to vector<8x1xf32>
    %20 = arith.subf %9, %19 : vector<8x1xf32>
    %c8_i32 = arith.constant 8 : i32
    %21 = arith.muli %arg0, %c8_i32 : i32
    %22 = tpu.iota {dimensions = array<i32: 0>} : vector<8x1xi32>
    %23 = vector.broadcast %21 : i32 to vector<8x1xi32>
    %24 = arith.addi %23, %22 : vector<8x1xi32>
    %c8_i32_7 = arith.constant 8 : i32
    %25 = vector.broadcast %c8_i32_7 : i32 to vector<8x1xi32>
    %26 = arith.cmpi slt, %24, %25 : vector<8x1xi32>
    %cst_8 = arith.constant 0.000000e+00 : f32
    %27 = vector.broadcast %cst_8 : f32 to vector<8x1xf32>
    %28 = arith.select %26, %20, %27 : vector<8x1xi1>, vector<8x1xf32>
    %29 = vector.shape_cast %28 : vector<8x1xf32> to vector<1x8x1xf32>
    %cst_9 = arith.constant dense<0.000000e+00> : vector<1xf32>
    %30 = vector.multi_reduction <add>, %29, %cst_9 [1, 2] : vector<1x8x1xf32> to vector<1xf32>
    %31 = vector.shape_cast %30 : vector<1xf32> to vector<1x1x1xf32>
    %32 = vector.extract %31[0, 0, 0] : f32 from vector<1x1x1xf32>
    %33 = vector.broadcast %32 : f32 to vector<1x1x1xf32>
    %c0_10 = arith.constant 0 : index
    %c0_11 = arith.constant 0 : index
    %c0_12 = arith.constant 0 : index
    %34 = vector.load %arg3[%c0_10, %c0_11, %c0_12] : memref<1x1x1xf32, #tpu.memory_space<vmem>>, vector<1x1x1xf32>
    tpu.vector_store %arg3[%c0_10, %c0_11, %c0_12], %33 {strides = array<i32>} : memref<1x1x1xf32, #tpu.memory_space<vmem>>, vector<1x1x1xf32>,
    return
  }
  func.func @transform_0(%arg0: i32) -> (i32, i32) {
    %c0_i32 = arith.constant 0 : i32
    %c0_i32_0 = arith.constant 0 : i32
    return %arg0, %c0_i32 : i32, i32
  }
  func.func @transform_1(%arg0: i32) -> (i32, i32) {
    %c0_i32 = arith.constant 0 : i32
    %c0_i32_0 = arith.constant 0 : i32
    return %arg0, %c0_i32 : i32, i32
  }
  func.func @transform_2(%arg0: i32) -> (i32, i32, i32) {
    %c0_i32 = arith.constant 0 : i32
    %c0_i32_0 = arith.constant 0 : i32
    %c0_i32_1 = arith.constant 0 : i32
    return %arg0, %c0_i32, %c0_i32_0 : i32, i32, i32
  }
}

</mosaic_0001>

<llo_original>
// kernel: tpu_custom_call.1
$region0: #{tpu_custom_call.1}
  #allocation0 [shape = 'u32[]', space=smem, size = 0x4, offset = 0x4, fixed_abs, tag = 'smem constant byte address 0x4 - core index']
  #allocation1 [shape = 'u32[144,128]{1,0:T(1,128)}', space=vmem, size = 0x12000, scoped, tag = 'internal scratch']
  %s0 = inlined_call_operand.vmem [shape: f32[8,32], index: 0, kind: input, shape index: {}]
  %s1 = inlined_call_operand.vmem [shape: s32[8,1], index: 1, kind: input, shape index: {}]
  %s2 = inlined_call_operand.hbm [shape: f32[1,1,1], index: 2, kind: output, shape index: {}]
  %s3 = sld [smem:[#allocation0]]
  $region18: #{tpu_custom_call.1} parent=0
    _
  %s5 = ssub.s32 1, %s3
  %s6 = scalar_select 0, %s5, %s3
  $region1: #{tpu_custom_call.1} parent=0
    #allocation2 [shape = 'u8[512]{0}', space=vmem, size = 0x400, scoped, tag = 'output window, operand 0, single buffered']
    #allocation3 [shape = 's32[1]{0}', space=sflag, size = 0x4, scoped, tag = 'scoped memory for tpu_custom_call.1']
    %7 = vsyncpa [#allocation3], 0
    // Predicated region
    $region2: #{tpu_custom_call.1} parent=1 // pred_check
      _
    $region3: #{tpu_custom_call.1} parent=1 // pred_check_branch
      %9 = sbr.rel (0) target = $region5
    $region4: #{tpu_custom_call.1} parent=1 // pred_region
      _
    $region5: #{tpu_custom_call.1} parent=1 // pred_fallthru
      _
    // Predicated region
    $region6: #{tpu_custom_call.1} parent=1 // pred_check
      _
    $region7: #{tpu_custom_call.1} parent=1 // pred_check_branch
      %11 = sbr.rel (0) target = $region9
    $region8: #{tpu_custom_call.1} parent=1 // pred_region
      _
    $region9: #{tpu_custom_call.1} parent=1 // pred_fallthru
      _
    %v12 = vld [vmem:[%s0] sm:$0xff]
    %v13 = vld [vmem:[%s1] sm:$0xff]
    %vm14 = vcmask 261120
    %v15 = vsel %vm14, %v12, -inf
    %16 = vmax.xlane.f32.xlu0 %v15
    %v17 = vpop.xlane.xlu0 %16
    %v18 = vsub.f32 %v12, %v17
    %v19 = vmul.f32 %v18, 1.442695
    %v20 = vpow.pop %v19
    %v21 = vsel %vm14, %v20, 0.0
    %22 = vadd.xlane.f32.xlu0 %v21
    %v23 = vpop.xlane.xlu0 %22
    %v24 = vlog2.pop %v23
    %v25 = vmul.f32 %v24, 0.6931472
    %v26 = vlaneseq
    %v27 = vand.u32 %v26, 127
    %28 = vset.pattern.permute.xlu0 0
    %29 = vperm.xlu0 %28, %v13
    %v30 = vpop.permute.xlu0 %29
    %vm31 = vcmp.eq.s32.totalorder %v27, %v30
    %v32 = vsel %vm31, 0.903125, 0.003125
    %v33 = vmul.f32 %v32, %v18
    %v34 = vsel %vm14, %v33, 0.0
    %35 = vadd.xlane.f32.xlu0 %v34
    %v36 = vpop.xlane.xlu0 %35
    %v37 = vsub.f32 %v25, %v36
    %s38 = smul.u32 0, 8
    %v39 = vlaneseq
    %v40 = vshrl.u32 %v39, 7
    %v41 = vstv %s38
    %v42 = vadd.s32 %v41, %v40
    %vm43 = vcmp.lt.s32.totalorder %v42, 8
    %v44 = vsel %vm43, %v37, 0.0
    %vm45 = vcmask 7168
    %v46 = vsel %vm45, %v44, 0.0
    %47 = vadd.xlane.f32.xlu0 %v46
    %v48 = vpop.xlane.xlu0 %47
    %v49 = vrot.slane %v48, 4
    %v50 = vadd.f32 %v48, %v49
    %v51 = vrot.slane %v50, 2
    %v52 = vadd.f32 %v50, %v51
    %v53 = vrot.slane %v52, 1
    %v54 = vadd.f32 %v52, %v53
    %s55 = vtos %v54
    %v56 = vstv %s55
    %vm57 = vcmask 0
    %58 = vst.msk [vmem:[#allocation2] sm:$0x1] %vm57, %v56
    // Predicated region
    $region10: #{tpu_custom_call.1} parent=1 // pred_check
      _
    $region11: #{tpu_custom_call.1} parent=1 // pred_check_branch
      %60 = sbr.rel (0) target = $region13
    $region12: #{tpu_custom_call.1} parent=1 // pred_region
      %s62 = ssub.s32 16, 16
      %63 = vsyncadd [#allocation3], %s62
      %s65 = sshll.u32 [#allocation2], 4
      %s66 = int_to_ptr.vmem [resolvable:$true] %s65
      %68 = dma.vmem_to_hbm [thread:$0]  %s66, 16, %s2, [#allocation3]
    $region13: #{tpu_custom_call.1} parent=1 // pred_fallthru
      _
    // Predicated region
    $region14: #{tpu_custom_call.1} parent=1 // pred_check
      _
    $region15: #{tpu_custom_call.1} parent=1 // pred_check_branch
      %70 = sbr.rel (0) target = $region17
    $region16: #{tpu_custom_call.1} parent=1 // pred_region
      %71 = dma.done [#allocation3], 16
    $region17: #{tpu_custom_call.1} parent=1 // pred_fallthru
      _
    %72 = vsyncpa [#allocation3], 1

</llo_original>
